<compile_context>
chip_gen: v5e
topology: v5e:2x2
jax: 0.10.0
libtpu: 0.0.40
codegen_flags: <defaults>
</compile_context>

<pallas_src>
import jax
import jax.numpy as jnp
from jax.experimental import pallas as pl
from jax.experimental.pallas import tpu as pltpu


def _disc_kernel(bias_ref, u_ref, h1_ref, h2_ref, h3_ref, h4_ref, o_ref):
    """Scores one row-tile of nodes for all four (h, c) pairings on the MXU.

    bias_ref : SMEM (1,)          bilinear bias
    u_ref    : VMEM (4, n_h, 4)   u_ref[k][:, k] = W@c vector for score k,
                                  zeros elsewhere:
                                    k=0: W@c1 (pairs with h2 -> sc_1)
                                    k=1: W@c2 (pairs with h1 -> sc_2)
                                    k=2: W@c1 (pairs with h4 -> sc_3)
                                    k=3: W@c2 (pairs with h3 -> sc_4)
    h*_ref   : VMEM (tile, n_h)   row tiles of h1..h4 (kept in input dtype)
    o_ref    : VMEM (tile, 4)     columns = [sc_1, sc_2, sc_3, sc_4]
    """
    # Because each u_ref[k] is nonzero only in column k, summing the four
    # (tile, 4) partial products places every score in its own output column.
    s = jnp.dot(h2_ref[...], u_ref[0], preferred_element_type=jnp.float32)
    s += jnp.dot(h1_ref[...], u_ref[1], preferred_element_type=jnp.float32)
    s += jnp.dot(h4_ref[...], u_ref[2], preferred_element_type=jnp.float32)
    s += jnp.dot(h3_ref[...], u_ref[3], preferred_element_type=jnp.float32)
    o_ref[...] = s + bias_ref[0]


def _round_up(x, m):
    return ((x + m - 1) // m) * m


def _choose_tile(n, n_h, itemsize):
    """Row tile selection.

    * small N (<= 1024): one full-extent block, grid=(1,) (overhead-bound).
    * large N: largest tile (multiple of 128, capped at 8192) such that the
      four double-buffered (tile, n_h) input blocks fit a ~16 MiB budget —
      safely inside the 32 MiB scoped-VMEM default on v5e/v6e/v7x — while
      guaranteeing at least 2 grid steps so v7x's two TensorCores both work.
    """
    if n <= 1024:
        return n
    budget = 16 * 1024 * 1024                   # bytes for the 4 h input blocks
    per_row = 4 * 2 * n_h * itemsize            # 4 inputs x double buffer
    cap = max(128, min(8192, (budget // per_row) // 128 * 128))
    half = _round_up((n + 1) // 2, 128)         # ensures >= 2 grid steps
    return min(cap, half)


def discriminator_forward(c1, c2, h1, h2, h3, h4, weight, bias):
    """Pallas implementation of Discriminator.forward.

    c1, c2 : (n_h,)       graph summaries
    h1..h4 : (N, n_h)     node representations
    weight : (n_h, n_h)   squeezed (out_features=1) slice of torch Bilinear weight
    bias   : (1,)         bilinear bias
    returns: (4N,) logits = [sc_1, sc_2, sc_3, sc_4]
    """
    n, n_h = h1.shape
    assert h2.shape == h3.shape == h4.shape == (n, n_h)
    assert c1.shape == c2.shape == (n_h,)
    assert weight.shape == (n_h, n_h), (
        "weight must be the squeezed (n_h, n_h) slice of torch's (1, n_h, n_h) "
        "Bilinear weight")

    # Hoisted precompute (tiny): u_k = W @ c_k  =>  score(x, c_k) = x . u_k + b.
    w32 = weight.astype(jnp.float32)
    u1 = w32 @ c1.astype(jnp.float32)           # (n_h,)
    u2 = w32 @ c2.astype(jnp.float32)           # (n_h,)

    # Block-column scoring matrices: u_blk[k, :, k] = vector used by score k.
    u_blk = jnp.zeros((4, n_h, 4), jnp.float32)
    u_blk = u_blk.at[0, :, 0].set(u1)           # sc_1 = f_k(h2, c1)
    u_blk = u_blk.at[1, :, 1].set(u2)           # sc_2 = f_k(h1, c2)
    u_blk = u_blk.at[2, :, 2].set(u1)           # sc_3 = f_k(h4, c1)
    u_blk = u_blk.at[3, :, 3].set(u2)           # sc_4 = f_k(h3, c2)
    if h1.dtype == jnp.bfloat16:
        # Keep bf16 activations native into the MXU (f32 accumulation via
        # preferred_element_type) -> half the HBM bytes on v6e/v7x.
        u_blk = u_blk.astype(jnp.bfloat16)

    itemsize = max(jnp.dtype(h1.dtype).itemsize, 4)
    tile = _choose_tile(n, n_h, itemsize)
    grid = (pl.cdiv(n, tile),)                  # ragged N: masked last block

    out = pl.pallas_call(
        _disc_kernel,
        out_shape=jax.ShapeDtypeStruct((n, 4), jnp.float32),
        grid_spec=pltpu.PrefetchScalarGridSpec(
            num_scalar_prefetch=0,
            grid=grid,
            in_specs=[
                pl.BlockSpec(memory_space=pltpu.MemorySpace.SMEM),  # bias
                pl.BlockSpec((4, n_h, 4), lambda i: (0, 0, 0)),     # u_blk
                pl.BlockSpec((tile, n_h), lambda i: (i, 0)),        # h1
                pl.BlockSpec((tile, n_h), lambda i: (i, 0)),        # h2
                pl.BlockSpec((tile, n_h), lambda i: (i, 0)),        # h3
                pl.BlockSpec((tile, n_h), lambda i: (i, 0)),        # h4
            ],
            out_specs=pl.BlockSpec((tile, 4), lambda i: (i, 0)),
        ),
        compiler_params=pltpu.CompilerParams(
            dimension_semantics=("parallel",)),
    )(bias.astype(jnp.float32), u_blk, h1, h2, h3, h4)

    # Columns are [sc_1, sc_2, sc_3, sc_4]; transpose + row-major reshape of
    # the tiny (N, 4) result reproduces torch.cat([sc_1, sc_2, sc_3, sc_4], 0).
    return out.T.reshape(4 * n)


def init_bilinear_params(key, n_h):
    """Deterministic xavier_uniform init for nn.Bilinear(n_h, n_h, 1)."""
    # torch fan_in = n_h * n_h, fan_out = 1 * n_h  (3-D weight (1, n_h, n_h))
    fan_in, fan_out = n_h * n_h, n_h
    bound = (6.0 / (fan_in + fan_out)) ** 0.5
    w = jax.random.uniform(key, (n_h, n_h), jnp.float32, -bound, bound)
    b = jnp.zeros((1,), jnp.float32)
    return w, b


def reference_forward(c1, c2, h1, h2, h3, h4, w, b):
    """Pure-JAX reference (mirrors the torch module exactly)."""
    def bilin(x, c):  # x: (N, n_h), c: (n_h,)
        return x @ (w @ c) + b[0]
    sc_1 = bilin(h2, c1)
    sc_2 = bilin(h1, c2)
    sc_3 = bilin(h4, c1)
    sc_4 = bilin(h3, c2)
    return jnp.concatenate([sc_1, sc_2, sc_3, sc_4], axis=0)


if __name__ == "__main__":
    n_h = 32     # hidden / feature dim
    n = 8        # number of nodes per view

    key = jax.random.PRNGKey(0)
    kw, kc1, kc2, kh1, kh2, kh3, kh4 = jax.random.split(key, 7)

    weight, bias = init_bilinear_params(kw, n_h)

    c1 = jax.random.normal(kc1, (n_h,), jnp.float32)
    c2 = jax.random.normal(kc2, (n_h,), jnp.float32)
    h1 = jax.random.normal(kh1, (n, n_h), jnp.float32)
    h2 = jax.random.normal(kh2, (n, n_h), jnp.float32)
    h3 = jax.random.normal(kh3, (n, n_h), jnp.float32)
    h4 = jax.random.normal(kh4, (n, n_h), jnp.float32)

    logits = discriminator_forward(c1, c2, h1, h2, h3, h4, weight, bias)
    logits = jax.block_until_ready(logits)

    ref = reference_forward(c1, c2, h1, h2, h3, h4, weight, bias)
    assert logits.shape == (4 * n,)
    assert jnp.allclose(logits, ref, atol=1e-4, rtol=1e-4)

    print("KERNEL_OK")
</pallas_src>

<mosaic_0001>
module attributes {stable_mosaic.version = 11 : i64} {
  func.func @_disc_kernel(%arg0: i32, %arg1: memref<1xf32, #tpu.memory_space<smem>>, %arg2: memref<4x32x4xf32, #tpu.memory_space<vmem>>, %arg3: memref<8x32xf32, #tpu.memory_space<vmem>>, %arg4: memref<8x32xf32, #tpu.memory_space<vmem>>, %arg5: memref<8x32xf32, #tpu.memory_space<vmem>>, %arg6: memref<8x32xf32, #tpu.memory_space<vmem>>, %arg7: memref<8x4xf32, #tpu.memory_space<vmem>>) attributes {dimension_semantics = [#tpu.dimension_semantics<parallel>], iteration_bounds = array<i64: 1>, scalar_prefetch = 0 : i64, scratch_operands = 0 : i64, tpu.core_type = #tpu.core_type<tc>, window_params = [{transform_indices = @transform_0, window_bounds = array<i64: 1>}, {pipeline_mode = #tpu.pipeline_mode<synchronous>, transform_indices = @transform_1, window_bounds = array<i64: 4, 32, 4>}, {transform_indices = @transform_2, window_bounds = array<i64: 8, 32>}, {transform_indices = @transform_3, window_bounds = array<i64: 8, 32>}, {transform_indices = @transform_4, window_bounds = array<i64: 8, 32>}, {transform_indices = @transform_5, window_bounds = array<i64: 8, 32>}, {transform_indices = @transform_6, window_bounds = array<i64: 8, 4>}]} {
    %c0 = arith.constant 0 : index
    %c0_0 = arith.constant 0 : index
    %0 = vector.load %arg4[%c0, %c0_0] : memref<8x32xf32, #tpu.memory_space<vmem>>, vector<8x32xf32>
    %c0_1 = arith.constant 0 : index
    %c0_2 = arith.constant 0 : index
    %c0_3 = arith.constant 0 : index
    %1 = vector.load %arg2[%c0_1, %c0_2, %c0_3] : memref<4x32x4xf32, #tpu.memory_space<vmem>>, vector<1x32x4xf32>
    %2 = vector.shape_cast %1 : vector<1x32x4xf32> to vector<32x4xf32>
    %cst = arith.constant dense<0.000000e+00> : vector<8x4xf32>
    %3 = tpu.matmul %0, %2, %cst {dimension_numbers = #tpu.dot_dimension_numbers<[1], [0], [0], [1], [0, 0, 1, 1], [], []>} : vector<8x32xf32>, vector<32x4xf32>, vector<8x4xf32> -> vector<8x4xf32>
    %c0_4 = arith.constant 0 : index
    %c0_5 = arith.constant 0 : index
    %4 = vector.load %arg3[%c0_4, %c0_5] : memref<8x32xf32, #tpu.memory_space<vmem>>, vector<8x32xf32>
    %c1 = arith.constant 1 : index
    %c0_6 = arith.constant 0 : index
    %c0_7 = arith.constant 0 : index
    %5 = vector.load %arg2[%c1, %c0_6, %c0_7] : memref<4x32x4xf32, #tpu.memory_space<vmem>>, vector<1x32x4xf32>
    %6 = vector.shape_cast %5 : vector<1x32x4xf32> to vector<32x4xf32>
    %cst_8 = arith.constant dense<0.000000e+00> : vector<8x4xf32>
    %7 = tpu.matmul %4, %6, %cst_8 {dimension_numbers = #tpu.dot_dimension_numbers<[1], [0], [0], [1], [0, 0, 1, 1], [], []>} : vector<8x32xf32>, vector<32x4xf32>, vector<8x4xf32> -> vector<8x4xf32>
    %8 = arith.addf %3, %7 : vector<8x4xf32>
    %c0_9 = arith.constant 0 : index
    %c0_10 = arith.constant 0 : index
    %9 = vector.load %arg6[%c0_9, %c0_10] : memref<8x32xf32, #tpu.memory_space<vmem>>, vector<8x32xf32>
    %c2 = arith.constant 2 : index
    %c0_11 = arith.constant 0 : index
    %c0_12 = arith.constant 0 : index
    %10 = vector.load %arg2[%c2, %c0_11, %c0_12] : memref<4x32x4xf32, #tpu.memory_space<vmem>>, vector<1x32x4xf32>
    %11 = vector.shape_cast %10 : vector<1x32x4xf32> to vector<32x4xf32>
    %cst_13 = arith.constant dense<0.000000e+00> : vector<8x4xf32>
    %12 = tpu.matmul %9, %11, %cst_13 {dimension_numbers = #tpu.dot_dimension_numbers<[1], [0], [0], [1], [0, 0, 1, 1], [], []>} : vector<8x32xf32>, vector<32x4xf32>, vector<8x4xf32> -> vector<8x4xf32>
    %13 = arith.addf %8, %12 : vector<8x4xf32>
    %c0_14 = arith.constant 0 : index
    %c0_15 = arith.constant 0 : index
    %14 = vector.load %arg5[%c0_14, %c0_15] : memref<8x32xf32, #tpu.memory_space<vmem>>, vector<8x32xf32>
    %c3 = arith.constant 3 : index
    %c0_16 = arith.constant 0 : index
    %c0_17 = arith.constant 0 : index
    %15 = vector.load %arg2[%c3, %c0_16, %c0_17] : memref<4x32x4xf32, #tpu.memory_space<vmem>>, vector<1x32x4xf32>
    %16 = vector.shape_cast %15 : vector<1x32x4xf32> to vector<32x4xf32>
    %cst_18 = arith.constant dense<0.000000e+00> : vector<8x4xf32>
    %17 = tpu.matmul %14, %16, %cst_18 {dimension_numbers = #tpu.dot_dimension_numbers<[1], [0], [0], [1], [0, 0, 1, 1], [], []>} : vector<8x32xf32>, vector<32x4xf32>, vector<8x4xf32> -> vector<8x4xf32>
    %18 = arith.addf %13, %17 : vector<8x4xf32>
    %c0_19 = arith.constant 0 : index
    %19 = memref.load %arg1[%c0_19] : memref<1xf32, #tpu.memory_space<smem>>
    %20 = vector.broadcast %19 : f32 to vector<8x4xf32>
    %21 = arith.addf %18, %20 : vector<8x4xf32>
    %c0_20 = arith.constant 0 : index
    %c0_21 = arith.constant 0 : index
    %22 = vector.load %arg7[%c0_20, %c0_21] : memref<8x4xf32, #tpu.memory_space<vmem>>, vector<8x4xf32>
    tpu.vector_store %arg7[%c0_20, %c0_21], %21 {strides = array<i32>} : memref<8x4xf32, #tpu.memory_space<vmem>>, vector<8x4xf32>,
    return
  }
  func.func @transform_0(%arg0: i32) -> i32 {
    %c0_i32 = arith.constant 0 : i32
    %c0_i32_0 = arith.constant 0 : i32
    return %c0_i32 : i32
  }
  func.func @transform_1(%arg0: i32) -> (i32, i32, i32) {
    %c0_i32 = arith.constant 0 : i32
    %c0_i32_0 = arith.constant 0 : i32
    %c0_i32_1 = arith.constant 0 : i32
    %c0_i32_2 = arith.constant 0 : i32
    return %c0_i32, %c0_i32_0, %c0_i32_1 : i32, i32, i32
  }
  func.func @transform_2(%arg0: i32) -> (i32, i32) {
    %c0_i32 = arith.constant 0 : i32
    %c0_i32_0 = arith.constant 0 : i32
    return %arg0, %c0_i32 : i32, i32
  }
  func.func @transform_3(%arg0: i32) -> (i32, i32) {
    %c0_i32 = arith.constant 0 : i32
    %c0_i32_0 = arith.constant 0 : i32
    return %arg0, %c0_i32 : i32, i32
  }
  func.func @transform_4(%arg0: i32) -> (i32, i32) {
    %c0_i32 = arith.constant 0 : i32
    %c0_i32_0 = arith.constant 0 : i32
    return %arg0, %c0_i32 : i32, i32
  }
  func.func @transform_5(%arg0: i32) -> (i32, i32) {
    %c0_i32 = arith.constant 0 : i32
    %c0_i32_0 = arith.constant 0 : i32
    return %arg0, %c0_i32 : i32, i32
  }
  func.func @transform_6(%arg0: i32) -> (i32, i32) {
    %c0_i32 = arith.constant 0 : i32
    %c0_i32_0 = arith.constant 0 : i32
    return %arg0, %c0_i32 : i32, i32
  }
}

</mosaic_0001>

<llo_original>
// kernel: tpu_custom_call.1
$region0: #{tpu_custom_call.1}
  #allocation0 [shape = 'u32[]', space=smem, size = 0x4, offset = 0x4, fixed_abs, tag = 'smem constant byte address 0x4 - core index']
  #allocation1 [shape = 'u32[72,128]{1,0:T(1,128)}', space=vmem, size = 0x9000, scoped, tag = 'internal scratch']
  #allocation2 [shape = 'f32[1]{0:T(128)S(6)}', space=smem, size = 0x200, scoped, tag = 'scoped memory for tpu_custom_call.1']
  %s0 = inlined_call_operand.<no memory space> [shape: f32[1], index: 0, kind: input, shape index: {}]
  %s1 = inlined_call_operand.vmem [shape: f32[4,32,4], index: 1, kind: input, shape index: {}]
  %s2 = inlined_call_operand.vmem [shape: f32[8,32], index: 2, kind: input, shape index: {}]
  %s3 = inlined_call_operand.vmem [shape: f32[8,32], index: 3, kind: input, shape index: {}]
  %s4 = inlined_call_operand.vmem [shape: f32[8,32], index: 4, kind: input, shape index: {}]
  %s5 = inlined_call_operand.vmem [shape: f32[8,32], index: 5, kind: input, shape index: {}]
  %s6 = inlined_call_operand.vmem [shape: f32[8,4], index: 6, kind: output, shape index: {}]
  %s7 = sld [smem:[#allocation0]]
  $region34: #{tpu_custom_call.1} parent=0
    _
  %s9 = ssub.s32 1, %s7
  %s10 = scalar_select 0, %s9, %s7
  %11 = sst [smem:[#allocation2]] %s0
  // Predicated region
  $region2: #{tpu_custom_call.1} parent=0 // pred_check
    _
  $region3: #{tpu_custom_call.1} parent=0 // pred_check_branch
    %13 = sbr.rel (0) target = $region5
  $region4: #{tpu_custom_call.1} parent=0 // pred_region
    _
  $region5: #{tpu_custom_call.1} parent=0 // pred_fallthru
    _
  // Predicated region
  $region6: #{tpu_custom_call.1} parent=0 // pred_check
    _
  $region7: #{tpu_custom_call.1} parent=0 // pred_check_branch
    %15 = sbr.rel (0) target = $region9
  $region8: #{tpu_custom_call.1} parent=0 // pred_region
    _
  $region9: #{tpu_custom_call.1} parent=0 // pred_fallthru
    _
  // Predicated region
  $region10: #{tpu_custom_call.1} parent=0 // pred_check
    _
  $region11: #{tpu_custom_call.1} parent=0 // pred_check_branch
    %17 = sbr.rel (0) target = $region13
  $region12: #{tpu_custom_call.1} parent=0 // pred_region
    _
  $region13: #{tpu_custom_call.1} parent=0 // pred_fallthru
    _
  // Predicated region
  $region14: #{tpu_custom_call.1} parent=0 // pred_check
    _
  $region15: #{tpu_custom_call.1} parent=0 // pred_check_branch
    %19 = sbr.rel (0) target = $region17
  $region16: #{tpu_custom_call.1} parent=0 // pred_region
    _
  $region17: #{tpu_custom_call.1} parent=0 // pred_fallthru
    _
  // Predicated region
  $region18: #{tpu_custom_call.1} parent=0 // pred_check
    _
  $region19: #{tpu_custom_call.1} parent=0 // pred_check_branch
    %21 = sbr.rel (0) target = $region21
  $region20: #{tpu_custom_call.1} parent=0 // pred_region
    _
  $region21: #{tpu_custom_call.1} parent=0 // pred_fallthru
    _
  // Predicated region
  $region22: #{tpu_custom_call.1} parent=0 // pred_check
    _
  $region23: #{tpu_custom_call.1} parent=0 // pred_check_branch
    %23 = sbr.rel (0) target = $region25
  $region24: #{tpu_custom_call.1} parent=0 // pred_region
    _
  $region25: #{tpu_custom_call.1} parent=0 // pred_fallthru
    _
  %v24 = vld [vmem:[%s3] sm:$0xff]
  %v25 = vld [vmem:[%s1] sm:$0xff]
  %v26 = vld [vmem:[%s1 + $0x8] sm:$0xff]
  %v27 = vld [vmem:[%s1 + $0x10] sm:$0xff]
  %v28 = vld [vmem:[%s1 + $0x18] sm:$0xff]
  %v29 = vld [vmem:[%s2] sm:$0xff]
  %s30 = scalar_lea.vmem %s1, 32
  %v31 = vld [vmem:[%s30] sm:$0xff]
  %v32 = vld [vmem:[%s30 + $0x8] sm:$0xff]
  %v33 = vld [vmem:[%s30 + $0x10] sm:$0xff]
  %v34 = vld [vmem:[%s30 + $0x18] sm:$0xff]
  %vm35 = vcmask 261120
  %v37 = vsel %vm35, %v29, 0
  %39 = vmatpush.msra.mxu0 0.0
  %40 = vmatpush.msra.mxu0 0.0
  %41 = vmatpush.msra.mxu0 0.0
  %42 = vmatpush.msra.mxu0 0.0
  %43 = vmatpush.msra.mxu0 0.0
  %44 = vmatpush.msra.mxu0 0.0
  %45 = vmatpush.msra.mxu0 0.0
  %46 = vmatpush.msra.mxu0 0.0
  %47 = vmatpush.msra.mxu0 0.0
  %48 = vmatpush.msra.mxu0 0.0
  %49 = vmatpush.msra.mxu0 0.0
  %50 = vmatpush.msra.mxu0 0.0
  %51 = vmatpush.msra.mxu0 %v34
  %52 = vmatpush.msra.mxu0 %v33
  %53 = vmatpush.msra.mxu0 %v32
  %54 = vmatpush.msra.mxu0 %v31
  %55 = vmatmul.f32.gmra.mxu0 %v37
  %v56 = vpop.f32.mrf.mxu0
  %v57 = vadd.f32 0.0, %v56
  %58 = vdwg.mxu0
  %v60 = vsel %vm35, %v24, 0
  %62 = vmatpush.msra.mxu0 0.0
  %63 = vmatpush.msra.mxu0 0.0
  %64 = vmatpush.msra.mxu0 0.0
  %65 = vmatpush.msra.mxu0 0.0
  %66 = vmatpush.msra.mxu0 0.0
  %67 = vmatpush.msra.mxu0 0.0
  %68 = vmatpush.msra.mxu0 0.0
  %69 = vmatpush.msra.mxu0 0.0
  %70 = vmatpush.msra.mxu0 0.0
  %71 = vmatpush.msra.mxu0 0.0
  %72 = vmatpush.msra.mxu0 0.0
  %73 = vmatpush.msra.mxu0 0.0
  %74 = vmatpush.msra.mxu0 %v28
  %75 = vmatpush.msra.mxu0 %v27
  %76 = vmatpush.msra.mxu0 %v26
  %77 = vmatpush.msra.mxu0 %v25
  %78 = vmatmul.f32.gmra.mxu0 %v60
  %v79 = vpop.f32.mrf.mxu0
  %v80 = vadd.f32 %v57, %v79
  %81 = vdwg.mxu0
  %v82 = vld [vmem:[%s5] sm:$0xff]
  %s83 = scalar_lea.vmem %s1, 64
  %v84 = vld [vmem:[%s83] sm:$0xff]
  %v85 = vld [vmem:[%s83 + $0x8] sm:$0xff]
  %v86 = vld [vmem:[%s83 + $0x10] sm:$0xff]
  %v87 = vld [vmem:[%s83 + $0x18] sm:$0xff]
  %v89 = vsel %vm35, %v82, 0
  %91 = vmatpush.msra.mxu0 0.0
  %92 = vmatpush.msra.mxu0 0.0
  %93 = vmatpush.msra.mxu0 0.0
  %94 = vmatpush.msra.mxu0 0.0
  %95 = vmatpush.msra.mxu0 0.0
  %96 = vmatpush.msra.mxu0 0.0
  %97 = vmatpush.msra.mxu0 0.0
  %98 = vmatpush.msra.mxu0 0.0
  %99 = vmatpush.msra.mxu0 0.0
  %100 = vmatpush.msra.mxu0 0.0
  %101 = vmatpush.msra.mxu0 0.0
  %102 = vmatpush.msra.mxu0 0.0
  %103 = vmatpush.msra.mxu0 %v87
  %104 = vmatpush.msra.mxu0 %v86
  %105 = vmatpush.msra.mxu0 %v85
  %106 = vmatpush.msra.mxu0 %v84
  %107 = vmatmul.f32.gmra.mxu0 %v89
  %v108 = vpop.f32.mrf.mxu0
  %v109 = vadd.f32 0.0, %v108
  %110 = vdwg.mxu0
  %v111 = vadd.f32 %v80, %v109
  %v112 = vld [vmem:[%s4] sm:$0xff]
  %s113 = scalar_lea.vmem %s1, 96
  %v114 = vld [vmem:[%s113] sm:$0xff]
  %v115 = vld [vmem:[%s113 + $0x8] sm:$0xff]
  %v116 = vld [vmem:[%s113 + $0x10] sm:$0xff]
  %v117 = vld [vmem:[%s113 + $0x18] sm:$0xff]
  %v119 = vsel %vm35, %v112, 0
  %121 = vmatpush.msra.mxu0 0.0
  %122 = vmatpush.msra.mxu0 0.0
  %123 = vmatpush.msra.mxu0 0.0
  %124 = vmatpush.msra.mxu0 0.0
  %125 = vmatpush.msra.mxu0 0.0
  %126 = vmatpush.msra.mxu0 0.0
  %127 = vmatpush.msra.mxu0 0.0
  %128 = vmatpush.msra.mxu0 0.0
  %129 = vmatpush.msra.mxu0 0.0
  %130 = vmatpush.msra.mxu0 0.0
  %131 = vmatpush.msra.mxu0 0.0
  %132 = vmatpush.msra.mxu0 0.0
  %133 = vmatpush.msra.mxu0 %v117
  %134 = vmatpush.msra.mxu0 %v116
  %135 = vmatpush.msra.mxu0 %v115
  %136 = vmatpush.msra.mxu0 %v114
  %137 = vmatmul.f32.gmra.mxu0 %v119
  %v138 = vpop.f32.mrf.mxu0
  %v139 = vadd.f32 0.0, %v138
  %140 = vdwg.mxu0
  %v141 = vadd.f32 %v111, %v139
  %s142 = sld [smem:[#allocation2]]
  %v143 = vstv %s142
  %v144 = vadd.f32 %v141, %v143
  %vm145 = vcmask 31744
  %146 = vst.msk [vmem:[%s6] sm:$0xff] %vm145, %v144
  // Predicated region
  $region26: #{tpu_custom_call.1} parent=0 // pred_check
    _
  $region27: #{tpu_custom_call.1} parent=0 // pred_check_branch
    %148 = sbr.rel (0) target = $region29
  $region28: #{tpu_custom_call.1} parent=0 // pred_region
    _
  $region29: #{tpu_custom_call.1} parent=0 // pred_fallthru
    _
  // Predicated region
  $region30: #{tpu_custom_call.1} parent=0 // pred_check
    _
  $region31: #{tpu_custom_call.1} parent=0 // pred_check_branch
    %150 = sbr.rel (0) target = $region33
  $region32: #{tpu_custom_call.1} parent=0 // pred_region
    _
  $region33: #{tpu_custom_call.1} parent=0 // pred_fallthru
    _

</llo_original>
